<compile_context>
chip_gen: v5e
topology: v5e:2x2
jax: 0.10.0
libtpu: 0.0.40
codegen_flags: <defaults>
</compile_context>

<pallas_src>
import functools

import jax
import jax.numpy as jnp
import numpy as np
from jax import lax
from jax.experimental import pallas as pl
from jax.experimental.pallas import tpu as pltpu

_LN_EPS = 1e-5     # torch.nn.LayerNorm default eps
_VEC_EPS = 1e-8    # _norm_no_nan clamp


# --------------------------------------------------------------------------
# kernels
# --------------------------------------------------------------------------
def _scalar_ln_math(s, gamma, beta, ln_eps):
    s32 = s.astype(jnp.float32)
    mean = jnp.mean(s32, axis=-1, keepdims=True)
    centered = s32 - mean
    var = jnp.mean(centered * centered, axis=-1, keepdims=True)
    inv = lax.rsqrt(var + ln_eps)
    return (centered * inv) * gamma + beta


def _scalar_ln_kernel(s_ref, gamma_ref, beta_ref, o_ref, *, ln_eps):
    o_ref[...] = _scalar_ln_math(
        s_ref[...], gamma_ref[...], beta_ref[...], ln_eps
    ).astype(o_ref.dtype)


def _tuple_ln_kernel(s_ref, v_ref, gamma_ref, beta_ref, s_out_ref, v_out_ref,
                     *, n_vec_channels, ln_eps, vec_eps):
    # ---- scalar channels: LayerNorm over the last dim ---------------------
    s_out_ref[...] = _scalar_ln_math(
        s_ref[...], gamma_ref[...], beta_ref[...], ln_eps
    ).astype(s_out_ref.dtype)

    # ---- vector channels: divide by RMS channel norm ----------------------
    # v_ref layout: (tile_n, 3*C), lanes ordered [c0x c0y c0z c1x c1y c1z ...]
    c = n_vec_channels
    v = v_ref[...].astype(jnp.float32)
    sq = v * v

    # Constant (3C, C) group-sum matrix: lane l feeds channel l // 3.
    # Built without integer division; the tiny matmul rides the MXU slot.
    lane = lax.broadcasted_iota(jnp.int32, (3 * c, c), 0)
    chan3 = 3 * lax.broadcasted_iota(jnp.int32, (3 * c, c), 1)
    group = ((lane >= chan3) & (lane < chan3 + 3)).astype(jnp.float32)

    vn = jnp.dot(sq, group, preferred_element_type=jnp.float32)  # (tile_n, C)
    vn = jnp.maximum(vn, vec_eps)                                # per-channel clamp
    vmean = jnp.mean(vn, axis=-1, keepdims=True)                 # (tile_n, 1)
    vinv = lax.rsqrt(vmean)                                      # 1 / sqrt(mean)
    v_out_ref[...] = (v * vinv).astype(v_out_ref.dtype)          # per-row scale


# --------------------------------------------------------------------------
# wrappers
# --------------------------------------------------------------------------
def _pick_tile(n, max_tile):
    return n if n <= max_tile else max_tile  # max_tile is a multiple of 8


def _layer_norm_scalar_only(s, gamma, beta, ln_eps, max_tile_rows):
    f = s.shape[-1]
    lead = s.shape[:-1]
    n = int(np.prod(lead)) if lead else 1
    s2 = s.reshape(n, f)
    tile = _pick_tile(n, max_tile_rows)

    out = pl.pallas_call(
        functools.partial(_scalar_ln_kernel, ln_eps=ln_eps),
        out_shape=jax.ShapeDtypeStruct((n, f), s.dtype),
        grid=(pl.cdiv(n, tile),),
        in_specs=[
            pl.BlockSpec((tile, f), lambda i: (i, 0)),
            pl.BlockSpec((1, f), lambda i: (0, 0)),
            pl.BlockSpec((1, f), lambda i: (0, 0)),
        ],
        out_specs=pl.BlockSpec((tile, f), lambda i: (i, 0)),
        compiler_params=pltpu.CompilerParams(
            dimension_semantics=("parallel",),
            vmem_limit_bytes=32 * 1024 * 1024,
        ),
    )(s2, gamma.reshape(1, f).astype(jnp.float32),
       beta.reshape(1, f).astype(jnp.float32))
    return out.reshape(lead + (f,))


def layer_norm(x, gamma, beta, *, ln_eps=_LN_EPS, vec_eps=_VEC_EPS,
               max_tile_rows=256):
    """Forward pass of the combined LayerNorm module.

    x: a single array (scalar channels only, shape (..., F)) or a tuple
       (s, v) with s: (..., F) and v: (..., C, 3).
    gamma, beta: nn.LayerNorm affine params of shape (F,).
    """
    if not isinstance(x, (tuple, list)):
        return _layer_norm_scalar_only(x, gamma, beta, ln_eps, max_tile_rows)

    s, v = x
    f = s.shape[-1]
    lead = s.shape[:-1]
    c = v.shape[-2]
    assert v.shape[-1] == 3 and v.shape[:-2] == lead

    n = int(np.prod(lead)) if lead else 1
    s2 = s.reshape(n, f)
    v2 = v.reshape(n, c * 3)          # free row-major reshape, no transpose
    tile = _pick_tile(n, max_tile_rows)

    s_out, v_out = pl.pallas_call(
        functools.partial(_tuple_ln_kernel, n_vec_channels=c,
                          ln_eps=ln_eps, vec_eps=vec_eps),
        out_shape=(jax.ShapeDtypeStruct((n, f), s.dtype),
                   jax.ShapeDtypeStruct((n, c * 3), v.dtype)),
        grid=(pl.cdiv(n, tile),),
        in_specs=[
            pl.BlockSpec((tile, f), lambda i: (i, 0)),
            pl.BlockSpec((tile, c * 3), lambda i: (i, 0)),
            pl.BlockSpec((1, f), lambda i: (0, 0)),
            pl.BlockSpec((1, f), lambda i: (0, 0)),
        ],
        out_specs=(
            pl.BlockSpec((tile, f), lambda i: (i, 0)),
            pl.BlockSpec((tile, c * 3), lambda i: (i, 0)),
        ),
        compiler_params=pltpu.CompilerParams(
            dimension_semantics=("parallel",),
            vmem_limit_bytes=32 * 1024 * 1024,
        ),
    )(s2, v2, gamma.reshape(1, f).astype(jnp.float32),
       beta.reshape(1, f).astype(jnp.float32))

    return s_out.reshape(lead + (f,)), v_out.reshape(lead + (c, 3))


# --------------------------------------------------------------------------
# test
# --------------------------------------------------------------------------
if __name__ == "__main__":
    key = jax.random.PRNGKey(0)
    ks, kv, kg, kb = jax.random.split(key, 4)

    N, F, C = 16, 32, 8
    s = jax.random.normal(ks, (N, F), dtype=jnp.float32)
    v = jax.random.normal(kv, (N, C, 3), dtype=jnp.float32)
    gamma = 1.0 + 0.1 * jax.random.normal(kg, (F,), dtype=jnp.float32)
    beta = 0.1 * jax.random.normal(kb, (F,), dtype=jnp.float32)

    # Tuple path; small max_tile_rows forces a 2-step grid to exercise tiling.
    s_out, v_out = layer_norm((s, v), gamma, beta, max_tile_rows=8)
    jax.block_until_ready((s_out, v_out))

    # ----- numpy reference (matches the PyTorch module) --------------------
    s_np, v_np = np.asarray(s), np.asarray(v)
    g_np, b_np = np.asarray(gamma), np.asarray(beta)

    mean = s_np.mean(-1, keepdims=True)
    var = s_np.var(-1, keepdims=True)                     # biased, like torch
    s_ref = (s_np - mean) / np.sqrt(var + _LN_EPS) * g_np + b_np

    vn = np.clip((v_np ** 2).sum(-1, keepdims=True), _VEC_EPS, None)  # (N,C,1)
    vn = np.sqrt(vn.mean(-2, keepdims=True))                          # (N,1,1)
    v_ref = v_np / vn

    assert np.allclose(np.asarray(s_out), s_ref, rtol=1e-5, atol=1e-5)
    assert np.allclose(np.asarray(v_out), v_ref, rtol=1e-5, atol=1e-5)

    # Single-tensor path (scalar channels only).
    s_only = layer_norm(s, gamma, beta)
    jax.block_until_ready(s_only)
    assert np.allclose(np.asarray(s_only), s_ref, rtol=1e-5, atol=1e-5)

    print("KERNEL_OK")
</pallas_src>

<mosaic_0001>
module attributes {stable_mosaic.version = 11 : i64} {
  func.func @_tuple_ln_kernel(%arg0: i32, %arg1: memref<8x32xf32, #tpu.memory_space<vmem>>, %arg2: memref<8x24xf32, #tpu.memory_space<vmem>>, %arg3: memref<1x32xf32, #tpu.memory_space<vmem>>, %arg4: memref<1x32xf32, #tpu.memory_space<vmem>>, %arg5: memref<8x32xf32, #tpu.memory_space<vmem>>, %arg6: memref<8x24xf32, #tpu.memory_space<vmem>>) attributes {dimension_semantics = [#tpu.dimension_semantics<parallel>], iteration_bounds = array<i64: 2>, scalar_prefetch = 0 : i64, scratch_operands = 0 : i64, tpu.core_type = #tpu.core_type<tc>, window_params = [{transform_indices = @transform_0, window_bounds = array<i64: 8, 32>}, {transform_indices = @transform_1, window_bounds = array<i64: 8, 24>}, {pipeline_mode = #tpu.pipeline_mode<synchronous>, transform_indices = @transform_2, window_bounds = array<i64: 1, 32>}, {pipeline_mode = #tpu.pipeline_mode<synchronous>, transform_indices = @transform_3, window_bounds = array<i64: 1, 32>}, {transform_indices = @transform_4, window_bounds = array<i64: 8, 32>}, {transform_indices = @transform_5, window_bounds = array<i64: 8, 24>}]} {
    %c0 = arith.constant 0 : index
    %c0_0 = arith.constant 0 : index
    %0 = vector.load %arg1[%c0, %c0_0] : memref<8x32xf32, #tpu.memory_space<vmem>>, vector<8x32xf32>
    %c0_1 = arith.constant 0 : index
    %c0_2 = arith.constant 0 : index
    %1 = vector.load %arg3[%c0_1, %c0_2] : memref<1x32xf32, #tpu.memory_space<vmem>>, vector<1x32xf32>
    %c0_3 = arith.constant 0 : index
    %c0_4 = arith.constant 0 : index
    %2 = vector.load %arg4[%c0_3, %c0_4] : memref<1x32xf32, #tpu.memory_space<vmem>>, vector<1x32xf32>
    %cst = arith.constant dense<0.000000e+00> : vector<8xf32>
    %3 = vector.multi_reduction <add>, %0, %cst [1] : vector<8x32xf32> to vector<8xf32>
    %4 = vector.shape_cast %3 : vector<8xf32> to vector<8x1xf32>
    %cst_5 = arith.constant 3.200000e+01 : f32
    %5 = vector.broadcast %cst_5 : f32 to vector<8x1xf32>
    %6 = arith.divf %4, %5 : vector<8x1xf32>
    %7 = vector.broadcast %6 : vector<8x1xf32> to vector<8x32xf32>
    %8 = arith.subf %0, %7 : vector<8x32xf32>
    %9 = arith.mulf %8, %8 : vector<8x32xf32>
    %cst_6 = arith.constant dense<0.000000e+00> : vector<8xf32>
    %10 = vector.multi_reduction <add>, %9, %cst_6 [1] : vector<8x32xf32> to vector<8xf32>
    %11 = vector.shape_cast %10 : vector<8xf32> to vector<8x1xf32>
    %cst_7 = arith.constant 3.200000e+01 : f32
    %12 = vector.broadcast %cst_7 : f32 to vector<8x1xf32>
    %13 = arith.divf %11, %12 : vector<8x1xf32>
    %cst_8 = arith.constant 9.99999974E-6 : f32
    %14 = vector.broadcast %cst_8 : f32 to vector<8x1xf32>
    %15 = arith.addf %13, %14 : vector<8x1xf32>
    %16 = math.rsqrt %15 : vector<8x1xf32>
    %17 = vector.broadcast %16 : vector<8x1xf32> to vector<8x32xf32>
    %18 = arith.mulf %8, %17 : vector<8x32xf32>
    %19 = vector.broadcast %1 : vector<1x32xf32> to vector<8x32xf32>
    %20 = arith.mulf %18, %19 : vector<8x32xf32>
    %21 = vector.broadcast %2 : vector<1x32xf32> to vector<8x32xf32>
    %22 = arith.addf %20, %21 : vector<8x32xf32>
    %c0_9 = arith.constant 0 : index
    %c0_10 = arith.constant 0 : index
    %23 = vector.load %arg5[%c0_9, %c0_10] : memref<8x32xf32, #tpu.memory_space<vmem>>, vector<8x32xf32>
    tpu.vector_store %arg5[%c0_9, %c0_10], %22 {strides = array<i32>} : memref<8x32xf32, #tpu.memory_space<vmem>>, vector<8x32xf32>,
    %c0_11 = arith.constant 0 : index
    %c0_12 = arith.constant 0 : index
    %24 = vector.load %arg2[%c0_11, %c0_12] : memref<8x24xf32, #tpu.memory_space<vmem>>, vector<8x24xf32>
    %25 = arith.mulf %24, %24 : vector<8x24xf32>
    %26 = tpu.iota {dimensions = array<i32: 0>} : vector<24x8xi32>
    %27 = tpu.iota {dimensions = array<i32: 1>} : vector<24x8xi32>
    %c3_i32 = arith.constant 3 : i32
    %28 = vector.broadcast %c3_i32 : i32 to vector<24x8xi32>
    %29 = arith.muli %28, %27 : vector<24x8xi32>
    %30 = arith.cmpi sge, %26, %29 : vector<24x8xi32>
    %c3_i32_13 = arith.constant 3 : i32
    %31 = vector.broadcast %c3_i32_13 : i32 to vector<24x8xi32>
    %32 = arith.addi %29, %31 : vector<24x8xi32>
    %33 = arith.cmpi slt, %26, %32 : vector<24x8xi32>
    %34 = arith.andi %30, %33 : vector<24x8xi1>
    %35 = arith.extui %34 : vector<24x8xi1> to vector<24x8xi32>
    %36 = arith.sitofp %35 : vector<24x8xi32> to vector<24x8xf32>
    %cst_14 = arith.constant dense<0.000000e+00> : vector<8x8xf32>
    %37 = tpu.matmul %25, %36, %cst_14 {dimension_numbers = #tpu.dot_dimension_numbers<[1], [0], [0], [1], [0, 0, 1, 1], [], []>} : vector<8x24xf32>, vector<24x8xf32>, vector<8x8xf32> -> vector<8x8xf32>
    %cst_15 = arith.constant 9.99999993E-9 : f32
    %38 = vector.broadcast %cst_15 : f32 to vector<8x8xf32>
    %39 = arith.maximumf %37, %38 : vector<8x8xf32>
    %cst_16 = arith.constant dense<0.000000e+00> : vector<8xf32>
    %40 = vector.multi_reduction <add>, %39, %cst_16 [1] : vector<8x8xf32> to vector<8xf32>
    %41 = vector.shape_cast %40 : vector<8xf32> to vector<8x1xf32>
    %cst_17 = arith.constant 8.000000e+00 : f32
    %42 = vector.broadcast %cst_17 : f32 to vector<8x1xf32>
    %43 = arith.divf %41, %42 : vector<8x1xf32>
    %44 = math.rsqrt %43 : vector<8x1xf32>
    %45 = vector.broadcast %44 : vector<8x1xf32> to vector<8x24xf32>
    %46 = arith.mulf %24, %45 : vector<8x24xf32>
    %c0_18 = arith.constant 0 : index
    %c0_19 = arith.constant 0 : index
    %47 = vector.load %arg6[%c0_18, %c0_19] : memref<8x24xf32, #tpu.memory_space<vmem>>, vector<8x24xf32>
    tpu.vector_store %arg6[%c0_18, %c0_19], %46 {strides = array<i32>} : memref<8x24xf32, #tpu.memory_space<vmem>>, vector<8x24xf32>,
    return
  }
  func.func @transform_0(%arg0: i32) -> (i32, i32) {
    %c0_i32 = arith.constant 0 : i32
    %c0_i32_0 = arith.constant 0 : i32
    return %arg0, %c0_i32 : i32, i32
  }
  func.func @transform_1(%arg0: i32) -> (i32, i32) {
    %c0_i32 = arith.constant 0 : i32
    %c0_i32_0 = arith.constant 0 : i32
    return %arg0, %c0_i32 : i32, i32
  }
  func.func @transform_2(%arg0: i32) -> (i32, i32) {
    %c0_i32 = arith.constant 0 : i32
    %c0_i32_0 = arith.constant 0 : i32
    %c0_i32_1 = arith.constant 0 : i32
    return %c0_i32, %c0_i32_0 : i32, i32
  }
  func.func @transform_3(%arg0: i32) -> (i32, i32) {
    %c0_i32 = arith.constant 0 : i32
    %c0_i32_0 = arith.constant 0 : i32
    %c0_i32_1 = arith.constant 0 : i32
    return %c0_i32, %c0_i32_0 : i32, i32
  }
  func.func @transform_4(%arg0: i32) -> (i32, i32) {
    %c0_i32 = arith.constant 0 : i32
    %c0_i32_0 = arith.constant 0 : i32
    return %arg0, %c0_i32 : i32, i32
  }
  func.func @transform_5(%arg0: i32) -> (i32, i32) {
    %c0_i32 = arith.constant 0 : i32
    %c0_i32_0 = arith.constant 0 : i32
    return %arg0, %c0_i32 : i32, i32
  }
}

</mosaic_0001>

<llo_original>
// kernel: tpu_custom_call.1
$region0: #{tpu_custom_call.1}
  #allocation0 [shape = 'u32[]', space=smem, size = 0x4, offset = 0x4, fixed_abs, tag = 'smem constant byte address 0x4 - core index']
  #allocation1 [shape = 'u32[72,128]{1,0:T(1,128)}', space=vmem, size = 0x9000, scoped, tag = 'internal scratch']
  %s0 = inlined_call_operand.hbm [shape: f32[16,32], index: 0, kind: input, shape index: {}]
  %s1 = inlined_call_operand.hbm [shape: f32[16,24], index: 1, kind: input, shape index: {}]
  %s2 = inlined_call_operand.vmem [shape: f32[1,32], index: 2, kind: input, shape index: {}]
  %s3 = inlined_call_operand.vmem [shape: f32[1,32], index: 3, kind: input, shape index: {}]
  %s4 = inlined_call_operand.hbm [shape: f32[16,32], index: 4, kind: output, shape index: {0}]
  %s5 = inlined_call_operand.hbm [shape: f32[16,24], index: 5, kind: output, shape index: {1}]
  %6 = xla_tuple %s4, %s5
  %s7 = sld [smem:[#allocation0]]
  $region65: #{tpu_custom_call.1} parent=0
    _
  %s9 = ssub.s32 1, %s7
  %s10 = scalar_select 0, %s9, %s7
  $region1: #{tpu_custom_call.1} parent=0
    #allocation2 [shape = 'u8[8192]{0}', space=vmem, size = 0x2000, scoped, tag = 'input window, operand 0']
    #allocation3 [shape = 's32[2]{0}', space=sflag, size = 0x8, scoped, tag = 'scoped memory for tpu_custom_call.1']
    #allocation4 [shape = 's32[2]{0}', space=sflag, size = 0x8, scoped, tag = 'scoped memory for tpu_custom_call.1']
    #allocation5 [shape = 'u8[8192]{0}', space=vmem, size = 0x2000, scoped, tag = 'input window, operand 1']
    #allocation6 [shape = 's32[2]{0}', space=sflag, size = 0x8, scoped, tag = 'scoped memory for tpu_custom_call.1']
    #allocation7 [shape = 'u8[8192]{0}', space=vmem, size = 0x2000, scoped, tag = 'output window, operand 0']
    #allocation8 [shape = 'u8[8192]{0}', space=vmem, size = 0x2000, scoped, tag = 'output window, operand 1']
    #allocation9 [shape = 's32[2]{0}', space=sflag, size = 0x8, scoped, tag = 'scoped memory for tpu_custom_call.1']
    %11 = vsyncpa [#allocation3], 0
    %s12 = scalar_lea.sflag [#allocation3], 1
    %13 = vsyncpa %s12, 0
    %14 = vsyncpa [#allocation6], 0
    %s15 = scalar_lea.sflag [#allocation6], 1
    %16 = vsyncpa %s15, 0
    %17 = vsyncpa [#allocation4], 0
    %s18 = scalar_lea.sflag [#allocation4], 1
    %19 = vsyncpa %s18, 0
    %20 = vsyncpa [#allocation9], 0
    %s21 = scalar_lea.sflag [#allocation9], 1
    %22 = vsyncpa %s21, 0
    loop: start=0, step=1, limit=4
    $region2: #{tpu_custom_call.1} parent=1 // loop_pre_header
      _
    $region3: #{tpu_custom_call.1} parent=1 // loop_header
      %s24 = sphi 0, %s28
      %p25 = scmp.ge.s32.totalorder %s24, 4
      %s34 = sphi 0, %s36
      %s37 = sphi 0, %s34
      %s38 = sphi 0, %s37
      %s54 = sphi 0, %s38
      %s60 = sphi 0, %s62
      %s63 = sphi 0, %s60
      %s64 = sphi 0, %s63
      %s80 = sphi 0, %s64
      %s84 = sphi 0, %s84
      %s86 = sphi 0, %s84
      %s87 = sphi 0, %s86
      %s101 = sphi 0, %s87
      %s105 = sphi 0, %s105
      %s107 = sphi 0, %s105
      %s108 = sphi 0, %s107
      %s122 = sphi 0, %s108
      %s128 = sphi 0, %s130
      %s131 = sphi 0, %s128
      %s132 = sphi 0, %s131
      %s148 = sphi 0, %s132
      %s154 = sphi 0, %s156
      %s157 = sphi 0, %s154
      %s158 = sphi 0, %s157
      %s174 = sphi 0, %s158
    $region4: #{tpu_custom_call.1} parent=1 // loop_header_branch
      %27 = sbr.rel (%p25) target = $region8
    $region5: #{tpu_custom_call.1} parent=1 // loop_body
      %s29 = ssub.s32 %s24, 1
      %s30 = ssub.s32 %s24, 2
      %s31 = sadd.s32 %s24, 1
      %s32 = ssub.s32 %s24, %s31
      %p33 = scmp.eq.s32.totalorder %s32, 0
      %s35 = sadd.s32 %s34, 1
      %s36 = scalar_select %p33, %s34, %s35
      %p39 = pneg %p33
      %p40 = scmp.eq.s32.totalorder %s24, 1
      %p41 = por %p39, %p40
      %p42 = scmp.ne.s32.totalorder %s34, %s37
      %p43 = scmp.eq.s32.totalorder %s24, 0
      %p44 = por %p42, %p43
      %p45 = scmp.ne.s32.totalorder %s34, %s37
      %p46 = scmp.eq.s32.totalorder %s29, 1
      %p47 = por %p45, %p46
      %p48 = scmp.ne.s32.totalorder %s37, %s38
      %p49 = scmp.eq.s32.totalorder %s29, 0
      %p50 = por %p48, %p49
      %p51 = scmp.ne.s32.totalorder %s37, %s38
      %p52 = scmp.eq.s32.totalorder %s30, 1
      %p53 = por %p51, %p52
      %p55 = scmp.ne.s32.totalorder %s38, %s54
      %p56 = scmp.eq.s32.totalorder %s30, 0
      %p57 = por %p55, %p56
      %s58 = ssub.s32 %s24, %s31
      %p59 = scmp.eq.s32.totalorder %s58, 0
      %s61 = sadd.s32 %s60, 1
      %s62 = scalar_select %p59, %s60, %s61
      %p65 = pneg %p59
      %p66 = scmp.eq.s32.totalorder %s24, 1
      %p67 = por %p65, %p66
      %p68 = scmp.ne.s32.totalorder %s60, %s63
      %p69 = scmp.eq.s32.totalorder %s24, 0
      %p70 = por %p68, %p69
      %p71 = scmp.ne.s32.totalorder %s60, %s63
      %p72 = scmp.eq.s32.totalorder %s29, 1
      %p73 = por %p71, %p72
      %p74 = scmp.ne.s32.totalorder %s63, %s64
      %p75 = scmp.eq.s32.totalorder %s29, 0
      %p76 = por %p74, %p75
      %p77 = scmp.ne.s32.totalorder %s63, %s64
      %p78 = scmp.eq.s32.totalorder %s30, 1
      %p79 = por %p77, %p78
      %p81 = scmp.ne.s32.totalorder %s64, %s80
      %p82 = scmp.eq.s32.totalorder %s30, 0
      %p83 = por %p81, %p82
      %s85 = sadd.s32 %s84, 1
      %p88 = scmp.eq.s32.totalorder %s24, 1
      %p89 = scmp.ne.s32.totalorder %s84, %s86
      %p90 = scmp.eq.s32.totalorder %s24, 0
      %p91 = por %p89, %p90
      %p92 = scmp.ne.s32.totalorder %s84, %s86
      %p93 = scmp.eq.s32.totalorder %s29, 1
      %p94 = por %p92, %p93
      %p95 = scmp.ne.s32.totalorder %s86, %s87
      %p96 = scmp.eq.s32.totalorder %s29, 0
      %p97 = por %p95, %p96
      %p98 = scmp.ne.s32.totalorder %s86, %s87
      %p99 = scmp.eq.s32.totalorder %s30, 1
      %p100 = por %p98, %p99
      %p102 = scmp.ne.s32.totalorder %s87, %s101
      %p103 = scmp.eq.s32.totalorder %s30, 0
      %p104 = por %p102, %p103
      %s106 = sadd.s32 %s105, 1
      %p109 = scmp.eq.s32.totalorder %s24, 1
      %p110 = scmp.ne.s32.totalorder %s105, %s107
      %p111 = scmp.eq.s32.totalorder %s24, 0
      %p112 = por %p110, %p111
      %p113 = scmp.ne.s32.totalorder %s105, %s107
      %p114 = scmp.eq.s32.totalorder %s29, 1
      %p115 = por %p113, %p114
      %p116 = scmp.ne.s32.totalorder %s107, %s108
      %p117 = scmp.eq.s32.totalorder %s29, 0
      %p118 = por %p116, %p117
      %p119 = scmp.ne.s32.totalorder %s107, %s108
      %p120 = scmp.eq.s32.totalorder %s30, 1
      %p121 = por %p119, %p120
      %p123 = scmp.ne.s32.totalorder %s108, %s122
      %p124 = scmp.eq.s32.totalorder %s30, 0
      %p125 = por %p123, %p124
      %s126 = ssub.s32 %s24, %s31
      %p127 = scmp.eq.s32.totalorder %s126, 0
      %s129 = sadd.s32 %s128, 1
      %s130 = scalar_select %p127, %s128, %s129
      %p133 = pneg %p127
      %p134 = scmp.eq.s32.totalorder %s24, 1
      %p135 = por %p133, %p134
      %p136 = scmp.ne.s32.totalorder %s128, %s131
      %p137 = scmp.eq.s32.totalorder %s24, 0
      %p138 = por %p136, %p137
      %p139 = scmp.ne.s32.totalorder %s128, %s131
      %p140 = scmp.eq.s32.totalorder %s29, 1
      %p141 = por %p139, %p140
      %p142 = scmp.ne.s32.totalorder %s131, %s132
      %p143 = scmp.eq.s32.totalorder %s29, 0
      %p144 = por %p142, %p143
      %p145 = scmp.ne.s32.totalorder %s131, %s132
      %p146 = scmp.eq.s32.totalorder %s30, 1
      %p147 = por %p145, %p146
      %p149 = scmp.ne.s32.totalorder %s132, %s148
      %p150 = scmp.eq.s32.totalorder %s30, 0
      %p151 = por %p149, %p150
      %s152 = ssub.s32 %s24, %s31
      %p153 = scmp.eq.s32.totalorder %s152, 0
      %s155 = sadd.s32 %s154, 1
      %s156 = scalar_select %p153, %s154, %s155
      %p159 = pneg %p153
      %p160 = scmp.eq.s32.totalorder %s24, 1
      %p161 = por %p159, %p160
      %p162 = scmp.ne.s32.totalorder %s154, %s157
      %p163 = scmp.eq.s32.totalorder %s24, 0
      %p164 = por %p162, %p163
      %p165 = scmp.ne.s32.totalorder %s154, %s157
      %p166 = scmp.eq.s32.totalorder %s29, 1
      %p167 = por %p165, %p166
      %p168 = scmp.ne.s32.totalorder %s157, %s158
      %p169 = scmp.eq.s32.totalorder %s29, 0
      %p170 = por %p168, %p169
      %p171 = scmp.ne.s32.totalorder %s157, %s158
      %p172 = scmp.eq.s32.totalorder %s30, 1
      %p173 = por %p171, %p172
      %p175 = scmp.ne.s32.totalorder %s158, %s174
      %p176 = scmp.eq.s32.totalorder %s30, 0
      %p177 = por %p175, %p176
      %p178 = scmp.le.s32.totalorder 1, %s24
      %p179 = scmp.lt.s32.totalorder %s24, 3
      %p180 = pnand %p178, %p179
      %p181 = pneg %p180
      // Predicated region
      $region9: #{tpu_custom_call.1} parent=5 // pred_check
        _
      $region10: #{tpu_custom_call.1} parent=5 // pred_check_branch
        %183 = sbr.rel (%p180) target = $region12
      $region11: #{tpu_custom_call.1} parent=5 // pred_region
        %s184 = ssub.s32 %s24, 1
        // Predicated region
        $region13: #{tpu_custom_call.1} parent=11 // pred_check
          %p185 = pneg %p97
        $region14: #{tpu_custom_call.1} parent=11 // pred_check_branch
          %187 = sbr.rel (%p185) target = $region16
        $region15: #{tpu_custom_call.1} parent=11 // pred_region
          _
        $region16: #{tpu_custom_call.1} parent=11 // pred_fallthru
          _
        // Predicated region
        $region17: #{tpu_custom_call.1} parent=11 // pred_check
          %p188 = pneg %p118
        $region18: #{tpu_custom_call.1} parent=11 // pred_check_branch
          %190 = sbr.rel (%p188) target = $region20
        $region19: #{tpu_custom_call.1} parent=11 // pred_region
          _
        $region20: #{tpu_custom_call.1} parent=11 // pred_fallthru
          _
      $region12: #{tpu_custom_call.1} parent=5 // pred_fallthru
        _
      %p191 = scmp.lt.s32.totalorder %s24, 2
      // Predicated region
      $region21: #{tpu_custom_call.1} parent=5 // pred_check
        %p192 = pneg %p191
      $region22: #{tpu_custom_call.1} parent=5 // pred_check_branch
        %194 = sbr.rel (%p192) target = $region24
      $region23: #{tpu_custom_call.1} parent=5 // pred_region
        // Predicated region
        $region25: #{tpu_custom_call.1} parent=23 // pred_check
          %p195 = pneg %p44
        $region26: #{tpu_custom_call.1} parent=23 // pred_check_branch
          %197 = sbr.rel (%p195) target = $region28
        $region27: #{tpu_custom_call.1} parent=23 // pred_region
          %s198 = sand.u32 %s34, 1
          %s199 = scalar_lea.sflag [#allocation3], %s198
          %s200 = sand.u32 %s34, 1
          %s201 = smul.addr %s200, 8
          %s202 = scalar_lea.vmem [#allocation2], %s201
          %204 = vsyncadd %s199, 0
          %s205 = smul.addr %s24, 8
          %s206 = scalar_lea.hbm %s0, %s205
          %s208 = sshll.u32 %s206, 4
          %s209 = int_to_ptr.hbm [resolvable:$true] %s208
          %s210 = sshll.u32 %s202, 4
          %s211 = int_to_ptr.vmem [resolvable:$true] %s210
          %213 = dma.hbm_to_vmem [thread:$0]  %s209, 128, %s211, %s199
        $region28: #{tpu_custom_call.1} parent=23 // pred_fallthru
          _
        // Predicated region
        $region29: #{tpu_custom_call.1} parent=23 // pred_check
          %p214 = pneg %p70
        $region30: #{tpu_custom_call.1} parent=23 // pred_check_branch
          %216 = sbr.rel (%p214) target = $region32
        $region31: #{tpu_custom_call.1} parent=23 // pred_region
          %s217 = sand.u32 %s60, 1
          %s218 = scalar_lea.sflag [#allocation6], %s217
          %s219 = sand.u32 %s60, 1
          %s220 = smul.addr %s219, 8
          %s221 = scalar_lea.vmem [#allocation5], %s220
          %223 = vsyncadd %s218, 0
          %s224 = smul.addr %s24, 8
          %s225 = scalar_lea.hbm %s1, %s224
          %s227 = sshll.u32 %s225, 4
          %s228 = int_to_ptr.hbm [resolvable:$true] %s227
          %s229 = sshll.u32 %s221, 4
          %s230 = int_to_ptr.vmem [resolvable:$true] %s229
          %232 = dma.hbm_to_vmem [thread:$0]  %s228, 128, %s230, %s218
        $region32: #{tpu_custom_call.1} parent=23 // pred_fallthru
          _
      $region24: #{tpu_custom_call.1} parent=5 // pred_fallthru
        _
      %p233 = scmp.le.s32.totalorder 1, %s24
      %p234 = scmp.lt.s32.totalorder %s24, 3
      %p235 = pnand %p233, %p234
      %p236 = pneg %p235
      // Predicated region
      $region33: #{tpu_custom_call.1} parent=5 // pred_check
        _
      $region34: #{tpu_custom_call.1} parent=5 // pred_check_branch
        %238 = sbr.rel (%p235) target = $region36
      $region35: #{tpu_custom_call.1} parent=5 // pred_region
        %s239 = ssub.s32 %s24, 1
        %s240 = sand.u32 %s37, 1
        %s241 = scalar_lea.sflag [#allocation3], %s240
        %s242 = sand.u32 %s37, 1
        %s243 = smul.addr %s242, 8
        %s244 = scalar_lea.vmem [#allocation2], %s243
        // Predicated region
        $region37: #{tpu_custom_call.1} parent=35 // pred_check
          %p245 = pneg %p50
        $region38: #{tpu_custom_call.1} parent=35 // pred_check_branch
          %247 = sbr.rel (%p245) target = $region40
        $region39: #{tpu_custom_call.1} parent=35 // pred_region
          %249 = dma.done %s241, 128
        $region40: #{tpu_custom_call.1} parent=35 // pred_fallthru
          _
        %s250 = sand.u32 %s63, 1
        %s251 = scalar_lea.sflag [#allocation6], %s250
        %s252 = sand.u32 %s63, 1
        %s253 = smul.addr %s252, 8
        %s254 = scalar_lea.vmem [#allocation5], %s253
        // Predicated region
        $region41: #{tpu_custom_call.1} parent=35 // pred_check
          %p255 = pneg %p76
        $region42: #{tpu_custom_call.1} parent=35 // pred_check_branch
          %257 = sbr.rel (%p255) target = $region44
        $region43: #{tpu_custom_call.1} parent=35 // pred_region
          %259 = dma.done %s251, 128
        $region44: #{tpu_custom_call.1} parent=35 // pred_fallthru
          _
        %s260 = sand.u32 %s37, 1
        %s261 = scalar_lea.sflag [#allocation3], %s260
        %s262 = sand.u32 %s37, 1
        %s263 = smul.addr %s262, 8
        %s264 = scalar_lea.vmem [#allocation2], %s263
        %p265 = pneg %p50
        %p266 = pneg %p47
        %s267 = sand.u32 %s63, 1
        %s268 = scalar_lea.sflag [#allocation6], %s267
        %s269 = sand.u32 %s63, 1
        %s270 = smul.addr %s269, 8
        %s271 = scalar_lea.vmem [#allocation5], %s270
        %p272 = pneg %p76
        %p273 = pneg %p73
        %p274 = pneg %p97
        %p275 = pneg %p94
        %p276 = pneg %p118
        %p277 = pneg %p115
        %p278 = pneg %p144
        %p279 = pneg %p141
        %s280 = sand.u32 %s131, 1
        %s281 = scalar_lea.sflag [#allocation4], %s280
        %s282 = sand.u32 %s131, 1
        %s283 = smul.addr %s282, 8
        %s284 = scalar_lea.vmem [#allocation7], %s283
        %p285 = pneg %p170
        %p286 = pneg %p167
        %s287 = sand.u32 %s157, 1
        %s288 = scalar_lea.sflag [#allocation9], %s287
        %s289 = sand.u32 %s157, 1
        %s290 = smul.addr %s289, 8
        %s291 = scalar_lea.vmem [#allocation8], %s290
        %v292 = vld [vmem:[%s244] sm:$0xff]
        %v293 = vld [vmem:[%s2] sm:$0x1]
        %v294 = vld [vmem:[%s3] sm:$0x1]
        %vm295 = vcmask 261120
        %v296 = vsel %vm295, %v292, 0.0
        %297 = vadd.xlane.f32.xlu0 %v296
        %v298 = vpop.xlane.xlu0 %297
        %v299 = vrcp.pop 32.0
        %v300 = vmul.f32 32.0, %v299
        %v301 = vsub.f32 1.0, %v300
        %v302 = vmul.f32 %v299, %v301
        %v303 = vadd.f32 %v299, %v302
        %vm304 = vweird.f32 %v299
        %v305 = vsel %vm304, %v299, %v303
        %v306 = vmul.f32 %v298, %v305
        %v307 = vsub.f32 %v292, %v306
        %v308 = vmul.f32 %v307, %v307
        %v309 = vsel %vm295, %v308, 0.0
        %310 = vadd.xlane.f32.xlu0 %v309
        %v311 = vpop.xlane.xlu0 %310
        %v312 = vmul.f32 %v311, %v305
        %v313 = vadd.f32 %v312, 1e-05
        %v314 = vrsqrt.pop %v313
        %v315 = vmul.f32 %v314, %v313
        %v316 = vmul.f32 %v315, %v314
        %v317 = vmul.f32 0.5, %v316
        %v318 = vsub.f32 1.5, %v317
        %v319 = vmul.f32 %v314, %v318
        %vm320 = vweird.f32 %v313
        %vm321 = vweird.f32 %v314
        %vm322 = vmor %vm320, %vm321
        %v323 = vsel %vm322, %v314, %v319
        %v324 = vmul.f32 %v307, %v323
        %v326 = vperm.slane %v293, 0
        %v328 = vmul.f32 %v324, %v326
        %v330 = vperm.slane %v294, 0
        %v332 = vadd.f32 %v328, %v330
        %333 = vst.msk [vmem:[%s284] sm:$0xff] %vm295, %v332
        %v334 = vld [vmem:[%s254] sm:$0xff]
        %v335 = vmul.f32 %v334, %v334
        %v336 = vlaneseq
        %v337 = vshrl.u32 %v336, 7
        %v338 = vadd.s32 %v337, 8
        %v339 = vadd.s32 %v337, 16
        %v340 = vlaneseq
        %v341 = vand.u32 %v340, 127
        %v342 = vmul.u32 %v341, 3
        %vm343 = vcmp.ge.s32.totalorder %v337, %v342
        %vm344 = vcmp.ge.s32.totalorder %v338, %v342
        %vm345 = vcmp.ge.s32.totalorder %v339, %v342
        %v346 = vadd.s32 %v342, 3
        %vm347 = vcmp.lt.s32.totalorder %v337, %v346
        %vm348 = vcmp.lt.s32.totalorder %v338, %v346
        %vm349 = vcmp.lt.s32.totalorder %v339, %v346
        %vm350 = vmand %vm343, %vm347
        %vm351 = vmand %vm344, %vm348
        %vm352 = vmand %vm345, %vm349
        %v353 = vsel %vm350, 1, 0
        %v354 = vsel %vm351, 1, 0
        %v355 = vsel %vm352, 1, 0
        %v356 = vcvt.s32.f32 %v353
        %v357 = vcvt.s32.f32 %v354
        %v358 = vcvt.s32.f32 %v355
        %vm359 = vcmask 195584
        %v361 = vsel %vm359, %v335, 0
        %363 = vmatpush.msra.mxu0 0.0
        %364 = vmatpush.msra.mxu0 0.0
        %365 = vmatpush.msra.mxu0 0.0
        %366 = vmatpush.msra.mxu0 0.0
        %367 = vmatpush.msra.mxu0 0.0
        %368 = vmatpush.msra.mxu0 0.0
        %369 = vmatpush.msra.mxu0 0.0
        %370 = vmatpush.msra.mxu0 0.0
        %371 = vmatpush.msra.mxu0 0.0
        %372 = vmatpush.msra.mxu0 0.0
        %373 = vmatpush.msra.mxu0 0.0
        %374 = vmatpush.msra.mxu0 0.0
        %375 = vmatpush.msra.mxu0 0.0
        %376 = vmatpush.msra.mxu0 %v358
        %377 = vmatpush.msra.mxu0 %v357
        %378 = vmatpush.msra.mxu0 %v356
        %379 = vmatmul.f32.gmra.mxu0 %v361
        %v380 = vpop.f32.mrf.mxu0
        %v381 = vadd.f32 0.0, %v380
        %382 = vdwg.mxu0
        %v383 = vmax.f32 %v381, 1e-08
        %vm384 = vcmask 64512
        %v385 = vsel %vm384, %v383, 0.0
        %386 = vadd.xlane.f32.xlu0 %v385
        %v387 = vpop.xlane.xlu0 %386
        %v388 = vrcp.pop 8.0
        %v389 = vmul.f32 8.0, %v388
        %v390 = vsub.f32 1.0, %v389
        %v391 = vmul.f32 %v388, %v390
        %v392 = vadd.f32 %v388, %v391
        %vm393 = vweird.f32 %v388
        %v394 = vsel %vm393, %v388, %v392
        %v395 = vmul.f32 %v387, %v394
        %v396 = vrsqrt.pop %v395
        %v397 = vmul.f32 %v396, %v395
        %v398 = vmul.f32 %v397, %v396
        %v399 = vmul.f32 0.5, %v398
        %v400 = vsub.f32 1.5, %v399
        %v401 = vmul.f32 %v396, %v400
        %vm402 = vweird.f32 %v395
        %vm403 = vweird.f32 %v396
        %vm404 = vmor %vm402, %vm403
        %v405 = vsel %vm404, %v396, %v401
        %v406 = vmul.f32 %v334, %v405
        %407 = vst.msk [vmem:[%s291] sm:$0xff] %vm359, %v406
        %s408 = sand.u32 %s131, 1
        %s409 = scalar_lea.sflag [#allocation4], %s408
        %s410 = sand.u32 %s131, 1
        %s411 = smul.addr %s410, 8
        %s412 = scalar_lea.vmem [#allocation7], %s411
        %s413 = sand.u32 %s157, 1
        %s414 = scalar_lea.sflag [#allocation9], %s413
        %s415 = sand.u32 %s157, 1
        %s416 = smul.addr %s415, 8
        %s417 = scalar_lea.vmem [#allocation8], %s416
        // Predicated region
        $region45: #{tpu_custom_call.1} parent=35 // pred_check
          %p418 = pneg %p141
        $region46: #{tpu_custom_call.1} parent=35 // pred_check_branch
          %420 = sbr.rel (%p418) target = $region48
        $region47: #{tpu_custom_call.1} parent=35 // pred_region
          %422 = vsyncadd %s409, 0
          %s423 = smul.addr %s29, 8
          %s424 = scalar_lea.hbm %s4, %s423
          %s426 = sshll.u32 %s412, 4
          %s427 = int_to_ptr.vmem [resolvable:$true] %s426
          %s428 = sshll.u32 %s424, 4
          %s429 = int_to_ptr.hbm [resolvable:$true] %s428
          %431 = dma.vmem_to_hbm [thread:$0]  %s427, 128, %s429, %s409
        $region48: #{tpu_custom_call.1} parent=35 // pred_fallthru
          _
        // Predicated region
        $region49: #{tpu_custom_call.1} parent=35 // pred_check
          %p432 = pneg %p167
        $region50: #{tpu_custom_call.1} parent=35 // pred_check_branch
          %434 = sbr.rel (%p432) target = $region52
        $region51: #{tpu_custom_call.1} parent=35 // pred_region
          %436 = vsyncadd %s414, 0
          %s437 = smul.addr %s29, 8
          %s438 = scalar_lea.hbm %s5, %s437
          %s440 = sshll.u32 %s417, 4
          %s441 = int_to_ptr.vmem [resolvable:$true] %s440
          %s442 = sshll.u32 %s438, 4
          %s443 = int_to_ptr.hbm [resolvable:$true] %s442
          %445 = dma.vmem_to_hbm [thread:$0]  %s441, 128, %s443, %s414
        $region52: #{tpu_custom_call.1} parent=35 // pred_fallthru
          _
      $region36: #{tpu_custom_call.1} parent=5 // pred_fallthru
        _
      %p446 = scmp.le.s32.totalorder 2, %s24
      // Predicated region
      $region53: #{tpu_custom_call.1} parent=5 // pred_check
        %p447 = pneg %p446
      $region54: #{tpu_custom_call.1} parent=5 // pred_check_branch
        %449 = sbr.rel (%p447) target = $region56
      $region55: #{tpu_custom_call.1} parent=5 // pred_region
        %s450 = ssub.s32 %s24, 2
        // Predicated region
        $region57: #{tpu_custom_call.1} parent=55 // pred_check
          %p451 = pneg %p147
        $region58: #{tpu_custom_call.1} parent=55 // pred_check_branch
          %453 = sbr.rel (%p451) target = $region60
        $region59: #{tpu_custom_call.1} parent=55 // pred_region
          %s454 = sand.u32 %s132, 1
          %s455 = scalar_lea.sflag [#allocation4], %s454
          %s456 = sand.u32 %s132, 1
          %s457 = smul.addr %s456, 8
          %s458 = scalar_lea.vmem [#allocation7], %s457
          %460 = dma.done %s455, 128
        $region60: #{tpu_custom_call.1} parent=55 // pred_fallthru
          _
        // Predicated region
        $region61: #{tpu_custom_call.1} parent=55 // pred_check
          %p461 = pneg %p173
        $region62: #{tpu_custom_call.1} parent=55 // pred_check_branch
          %463 = sbr.rel (%p461) target = $region64
        $region63: #{tpu_custom_call.1} parent=55 // pred_region
          %s464 = sand.u32 %s158, 1
          %s465 = scalar_lea.sflag [#allocation9], %s464
          %s466 = sand.u32 %s158, 1
          %s467 = smul.addr %s466, 8
          %s468 = scalar_lea.vmem [#allocation8], %s467
          %470 = dma.done %s465, 128
        $region64: #{tpu_custom_call.1} parent=55 // pred_fallthru
          _
      $region56: #{tpu_custom_call.1} parent=5 // pred_fallthru
        _
    $region6: #{tpu_custom_call.1} parent=1 // loop_footer
      %s28 = sadd.s32 1, %s24
    $region7: #{tpu_custom_call.1} parent=1 // loop_footer_branch
      %23 = sbr.rel target = $region3
    $region8: #{tpu_custom_call.1} parent=1 // loop_exit
      _
    %471 = vsyncpa [#allocation3], 1
    %s472 = scalar_lea.sflag [#allocation3], 1
    %473 = vsyncpa %s472, 1
    %474 = vsyncpa [#allocation6], 1
    %s475 = scalar_lea.sflag [#allocation6], 1
    %476 = vsyncpa %s475, 1
    %477 = vsyncpa [#allocation4], 1
    %s478 = scalar_lea.sflag [#allocation4], 1
    %479 = vsyncpa %s478, 1
    %480 = vsyncpa [#allocation9], 1
    %s481 = scalar_lea.sflag [#allocation9], 1
    %482 = vsyncpa %s481, 1

</llo_original>
